<compile_context>
chip_gen: v5e
topology: v5e:2x2
jax: 0.10.0
libtpu: 0.0.40
codegen_flags: <defaults>
</compile_context>

<pallas_src>
import functools

import numpy as np
import jax
import jax.numpy as jnp
from jax.experimental import pallas as pl
from jax.experimental.pallas import tpu as pltpu

_MIN_CHUNK_BYTES = 1 << 20   # don't split a DMA below ~1 MiB per chunk
_MAX_CHUNKS = 8              # cap on concurrent DMAs


def _flatten_dma_kernel(x_ref, o_ref, sem, *, chunks):
    """x_ref / o_ref are raw HBM refs of shape (n, k).

    Issue a few concurrent row-range DMAs (HBM -> HBM, no VMEM bounce),
    then wait for all of them.
    """
    copies = []
    for c, (start, size) in enumerate(chunks):
        cp = pltpu.make_async_copy(
            x_ref.at[pl.ds(start, size), :],
            o_ref.at[pl.ds(start, size), :],
            sem.at[c],
        )
        cp.start()
        copies.append(cp)
    for cp in copies:
        cp.wait()


def _chunk_rows(n: int, total_bytes: int):
    """Split n rows into a small number of static, contiguous chunks."""
    num = min(n, _MAX_CHUNKS, max(1, total_bytes // _MIN_CHUNK_BYTES))
    num = max(1, num)
    base, rem = divmod(n, num)
    chunks = []
    start = 0
    for c in range(num):
        size = base + (1 if c < rem else 0)
        if size == 0:
            continue
        chunks.append((start, size))
        start += size
    return tuple(chunks)


def flatten_pallas(x: jax.Array, *, materialize: bool = True) -> jax.Array:
    """Pallas equivalent of torch's x.view(x.size(0), -1).

    With materialize=False this is the zero-cost metadata reshape (the
    recommended mode when the caller does not need a distinct buffer).
    With materialize=True the flattened result is written to a fresh HBM
    buffer via a direct HBM->HBM DMA kernel.
    """
    n = x.shape[0]
    k = int(np.prod(x.shape[1:])) if x.ndim > 1 else 1
    x2 = x.reshape(n, k)  # metadata-only row-major reshape
    if not materialize or x2.size == 0:
        return x2

    itemsize = np.dtype(x2.dtype).itemsize
    total_bytes = n * k * itemsize
    chunks = _chunk_rows(n, total_bytes)

    kernel = functools.partial(_flatten_dma_kernel, chunks=chunks)
    return pl.pallas_call(
        kernel,
        out_shape=jax.ShapeDtypeStruct((n, k), x2.dtype),
        in_specs=[pl.BlockSpec(memory_space=pl.ANY)],
        out_specs=pl.BlockSpec(memory_space=pl.ANY),
        scratch_shapes=[pltpu.SemaphoreType.DMA((len(chunks),))],
        cost_estimate=pl.CostEstimate(
            flops=0, transcendentals=0, bytes_accessed=2 * total_bytes),
    )(x2)


if __name__ == "__main__":
    key = jax.random.PRNGKey(0)
    key_a, key_b = jax.random.split(key)

    # NCHW feature map: (N=2, C=4, H=16, W=16).
    x = jax.random.normal(key_a, (2, 4, 16, 16), dtype=jnp.float32)
    ref = np.asarray(x).reshape(x.shape[0], -1)  # torch x.view(N, -1)

    out = jax.block_until_ready(flatten_pallas(x))
    assert out.shape == (2, 4 * 16 * 16), out.shape
    assert out.dtype == x.dtype
    np.testing.assert_array_equal(np.asarray(out), ref)

    # Zero-copy mode (pure metadata reshape).
    out_nc = jax.block_until_ready(flatten_pallas(x, materialize=False))
    np.testing.assert_array_equal(np.asarray(out_nc), ref)

    # Ragged case: K = 3*5*7 = 105 is not a multiple of 128 — the DMA path
    # is layout-agnostic so no special-casing is needed.
    y = jax.random.normal(key_b, (2, 3, 5, 7), dtype=jnp.float32)
    ref_y = np.asarray(y).reshape(y.shape[0], -1)
    out_y = jax.block_until_ready(flatten_pallas(y))
    assert out_y.shape == (2, 105), out_y.shape
    np.testing.assert_array_equal(np.asarray(out_y), ref_y)

    print("KERNEL_OK")
</pallas_src>

<mosaic_0001>
module attributes {stable_mosaic.version = 11 : i64} {
  func.func @_flatten_dma_kernel(%arg0: memref<2x1024xf32, #tpu.memory_space<any>>, %arg1: memref<2x1024xf32, #tpu.memory_space<any>>, %arg2: memref<1x!tpu.dma_semaphore, #tpu.memory_space<semaphore_mem>>) attributes {dimension_semantics = [], scalar_prefetch = 0 : i64, scratch_operands = 1 : i64, tpu.core_type = #tpu.core_type<tc>} {
    %c0_i32 = arith.constant 0 : i32
    %c0_i32_0 = arith.constant 0 : i32
    %c0_i32_1 = arith.constant 0 : i32
    %0 = tpu.memref_slice %arg0[%c0_i32_0, %c0_i32_1] : memref<2x1024xf32, #tpu.memory_space<any>> -> memref<2x1024xf32, #tpu.memory_space<any>>
    %c0_i32_2 = arith.constant 0 : i32
    %c0_i32_3 = arith.constant 0 : i32
    %1 = tpu.memref_slice %arg1[%c0_i32_2, %c0_i32_3] : memref<2x1024xf32, #tpu.memory_space<any>> -> memref<2x1024xf32, #tpu.memory_space<any>>
    %2 = tpu.memref_slice %arg2[%c0_i32] : memref<1x!tpu.dma_semaphore, #tpu.memory_space<semaphore_mem>> -> memref<1x!tpu.dma_semaphore, #tpu.memory_space<semaphore_mem>>
    %3 = tpu.memref_squeeze %2 : memref<1x!tpu.dma_semaphore, #tpu.memory_space<semaphore_mem>> -> memref<!tpu.dma_semaphore, #tpu.memory_space<semaphore_mem>>
    tpu.enqueue_dma source(%0 : memref<2x1024xf32, #tpu.memory_space<any>>) target(%1 : memref<2x1024xf32, #tpu.memory_space<any>>) target_semaphore(%3 : memref<!tpu.dma_semaphore, #tpu.memory_space<semaphore_mem>>)
    %c0_i32_4 = arith.constant 0 : i32
    %c0_i32_5 = arith.constant 0 : i32
    %c0_i32_6 = arith.constant 0 : i32
    %4 = tpu.memref_slice %arg0[%c0_i32_5, %c0_i32_6] : memref<2x1024xf32, #tpu.memory_space<any>> -> memref<2x1024xf32, #tpu.memory_space<any>>
    %c0_i32_7 = arith.constant 0 : i32
    %c0_i32_8 = arith.constant 0 : i32
    %5 = tpu.memref_slice %arg1[%c0_i32_7, %c0_i32_8] : memref<2x1024xf32, #tpu.memory_space<any>> -> memref<2x1024xf32, #tpu.memory_space<any>>
    %6 = tpu.memref_slice %arg2[%c0_i32_4] : memref<1x!tpu.dma_semaphore, #tpu.memory_space<semaphore_mem>> -> memref<1x!tpu.dma_semaphore, #tpu.memory_space<semaphore_mem>>
    %7 = tpu.memref_squeeze %6 : memref<1x!tpu.dma_semaphore, #tpu.memory_space<semaphore_mem>> -> memref<!tpu.dma_semaphore, #tpu.memory_space<semaphore_mem>>
    tpu.wait_dma2 semaphore(%7 : memref<!tpu.dma_semaphore, #tpu.memory_space<semaphore_mem>>) src(%4 : memref<2x1024xf32, #tpu.memory_space<any>>) dst(%5 : memref<2x1024xf32, #tpu.memory_space<any>>)
    return
  }
}

</mosaic_0001>

<llo_original>
// kernel: tpu_custom_call.1
$region0: #{tpu_custom_call.1}
  #allocation0 [shape = 'u32[]', space=smem, size = 0x4, offset = 0x4, fixed_abs, tag = 'smem constant byte address 0x4 - core index']
  #allocation1 [shape = 'u32[72,128]{1,0:T(1,128)}', space=vmem, size = 0x9000, scoped, tag = 'internal scratch']
  #allocation2 [shape = 's32[1]{0}', space=sflag, size = 0x4, scoped, tag = 'scratch operand']
  #allocation3 [shape = 's32[]', space=sflag, size = 0x4, offset = 0, fixed_abs, tag = 'sflag constant byte address 0x0 - dummy sync flag']
  #allocation4 [shape = 'u32[0]{0}', space=smem, size = 0, offset = 0, fixed_abs, tag = 'smem constant byte address 0x0 - null']
  %s0 = inlined_call_operand.hbm [shape: f32[2,1024], index: 0, kind: input, shape index: {}]
  %s1 = inlined_call_operand.hbm [shape: f32[2,1024], index: 1, kind: output, shape index: {}]
  %s2 = sld [smem:[#allocation0]]
  $region2: #{tpu_custom_call.1} parent=0
    _
  %s4 = ssub.s32 1, %s2
  %s5 = scalar_select 0, %s4, %s2
  %s7 = sshll.u32 1, 14
  %s8 = sxor.u32 4294967295, %s7
  %s10 = sshll.u32 %s0, 4
  %s11 = int_to_ptr.hbm [resolvable:$true] %s10
  %s12 = sshll.u32 %s1, 4
  %s13 = int_to_ptr.hbm [resolvable:$true] %s12
  %16 = dma.general %s11, 256, %s13, [#allocation2], [#allocation3], [#allocation4], 0, 0
  %s17 = smul.u32 2, 1
  %s18 = smul.u32 %s17, 8
  %s19 = sshll.u32 %s18, 4
  %20 = dma.done [#allocation2], %s19
  %21 = vsyncmov [#allocation2]
  %s22 = vpop.sfrf %21
  %p23 = scmp.eq.s32.totalorder %s22, 0
  %p24 = pneg %p23
  %26 = shalt.err (%p24)

</llo_original>
